<compile_context>
chip_gen: v7x
topology: tpu7x:2x2x1
jax: 0.10.0
libtpu: 0.0.40
codegen_flags: <defaults>
</compile_context>

<pallas_src>
import jax
import jax.numpy as jnp
from jax.experimental import pallas as pl
from jax.experimental.pallas import tpu as pltpu

INIT = 0.01

# Row-tile budget (see header): 3 inputs x 2 buffers x TILE_N x 128 lanes x 4 B
# = 12 MiB at TILE_N = 4096 -> safe on v5e/v6e (32 MiB scoped default) and v7x (64 MiB).
_MAX_TILE_N = 4096


def _round_up(x, m):
    return (x + m - 1) // m * m


def _copy_linear_kernel(ctx_ref, st_ref, inp_ref, vc_ref, vs_ref, vi_ref, b_ref,
                        out_ref):
    """One row tile: out[n] = <ctx[n], v_c> + <st[n], v_s> + <inp[n], v_i> + b.

    VPU multiply + XLU lane-reduction with an f32 accumulator; the (TILE_N,) result is
    stored as a lane-dense (1, TILE_N) row.
    """
    f32 = jnp.float32
    acc = jnp.sum(ctx_ref[...].astype(f32) * vc_ref[...].astype(f32), axis=-1)
    acc = acc + jnp.sum(st_ref[...].astype(f32) * vs_ref[...].astype(f32), axis=-1)
    acc = acc + jnp.sum(inp_ref[...].astype(f32) * vi_ref[...].astype(f32), axis=-1)
    acc = acc + b_ref[0, 0]
    out_ref[...] = acc[None, :].astype(out_ref.dtype)


def copy_linear_forward(context, state, input_, v_c, v_s, v_i, b, *, tile_n=None):
    """context: (..., Dc), state: (..., Ds), input_: (..., Di) -> (..., 1)."""
    lead_shape = context.shape[:-1]
    assert state.shape[:-1] == lead_shape and input_.shape[:-1] == lead_shape

    Dc = context.shape[-1]
    Ds = state.shape[-1]
    Di = input_.shape[-1]

    N = 1
    for d in lead_shape:
        N *= d

    out_dtype = jnp.result_type(context.dtype, state.dtype, input_.dtype,
                                v_c.dtype, v_s.dtype, v_i.dtype, b.dtype)

    if tile_n is None:
        tile_n = min(_MAX_TILE_N, _round_up(max(N, 1), 128))
    tile_n = max(128, _round_up(tile_n, 128))
    n_pad = _round_up(max(N, 1), tile_n)
    num_tiles = n_pad // tile_n

    # Keep inputs in their native dtype (kernel accumulates in f32). Pad rows up to a
    # tile multiple so the last grid step never reads/writes out of bounds; the padded
    # rows are sliced off the output below.
    def prep(x, d):
        x2 = x.reshape(N, d)
        if n_pad != N:
            x2 = jnp.pad(x2, ((0, n_pad - N), (0, 0)))
        return x2

    ctx2 = prep(context, Dc)
    st2 = prep(state, Ds)
    inp2 = prep(input_, Di)
    vc2 = v_c.reshape(1, Dc)
    vs2 = v_s.reshape(1, Ds)
    vi2 = v_i.reshape(1, Di)
    b2 = b.reshape(1, 1).astype(jnp.float32)

    out = pl.pallas_call(
        _copy_linear_kernel,
        out_shape=jax.ShapeDtypeStruct((num_tiles, tile_n), out_dtype),
        grid=(num_tiles,),
        in_specs=[
            pl.BlockSpec((tile_n, Dc), lambda i: (i, 0)),   # context rows
            pl.BlockSpec((tile_n, Ds), lambda i: (i, 0)),   # state rows
            pl.BlockSpec((tile_n, Di), lambda i: (i, 0)),   # input rows
            pl.BlockSpec((1, Dc), lambda i: (0, 0)),        # v_c (resident)
            pl.BlockSpec((1, Ds), lambda i: (0, 0)),        # v_s (resident)
            pl.BlockSpec((1, Di), lambda i: (0, 0)),        # v_i (resident)
            pl.BlockSpec(memory_space=pltpu.SMEM),          # bias (1, 1) scalar
        ],
        out_specs=pl.BlockSpec((1, tile_n), lambda i: (i, 0)),
        compiler_params=pltpu.CompilerParams(
            dimension_semantics=("parallel",)),
    )(ctx2, st2, inp2, vc2, vs2, vi2, b2)

    return out.reshape(n_pad)[:N].reshape(*lead_shape, 1)


if __name__ == "__main__":
    # Module dims (synthetic, deterministic init).
    context_dim, state_dim, input_dim = 32, 48, 16
    B, T = 2, 8

    key = jax.random.PRNGKey(0)
    k_vc, k_vs, k_vi, k_ctx, k_st, k_in = jax.random.split(key, 6)

    # Parameters: uniform(-INIT, INIT) like init.uniform_, bias = zeros(1).
    v_c = jax.random.uniform(k_vc, (context_dim,), jnp.float32, -INIT, INIT)
    v_s = jax.random.uniform(k_vs, (state_dim,), jnp.float32, -INIT, INIT)
    v_i = jax.random.uniform(k_vi, (input_dim,), jnp.float32, -INIT, INIT)
    b = jnp.zeros((1,), jnp.float32)

    # Inputs: (B, T, dim) each.
    context = jax.random.normal(k_ctx, (B, T, context_dim), jnp.float32)
    state = jax.random.normal(k_st, (B, T, state_dim), jnp.float32)
    input_ = jax.random.normal(k_in, (B, T, input_dim), jnp.float32)

    out = copy_linear_forward(context, state, input_, v_c, v_s, v_i, b)
    out = jax.block_until_ready(out)

    # Pure-JAX reference (same semantics as the PyTorch forward).
    ref = (context @ v_c[:, None] + state @ v_s[:, None]
           + input_ @ v_i[:, None] + b[None])
    assert out.shape == (B, T, 1)
    assert jnp.allclose(out, ref, atol=1e-5, rtol=1e-5)

    # Second check: row count that is not a tile multiple + multi-tile grid, exercising
    # the padding path and the pipelined row tiling.
    k2 = jax.random.PRNGKey(1)
    kc2, ks2, ki2 = jax.random.split(k2, 3)
    B2, T2 = 3, 100
    ctx_b = jax.random.normal(kc2, (B2, T2, context_dim), jnp.float32)
    st_b = jax.random.normal(ks2, (B2, T2, state_dim), jnp.float32)
    in_b = jax.random.normal(ki2, (B2, T2, input_dim), jnp.float32)
    out_b = copy_linear_forward(ctx_b, st_b, in_b, v_c, v_s, v_i, b, tile_n=128)
    out_b = jax.block_until_ready(out_b)
    ref_b = (ctx_b @ v_c[:, None] + st_b @ v_s[:, None]
             + in_b @ v_i[:, None] + b[None])
    assert out_b.shape == (B2, T2, 1)
    assert jnp.allclose(out_b, ref_b, atol=1e-5, rtol=1e-5)

    print("KERNEL_OK")
</pallas_src>

<mosaic_0001>
module attributes {stable_mosaic.version = 11 : i64} {
  func.func @_copy_linear_kernel(%arg0: i32, %arg1: memref<128x32xf32, #tpu.memory_space<vmem>>, %arg2: memref<128x48xf32, #tpu.memory_space<vmem>>, %arg3: memref<128x16xf32, #tpu.memory_space<vmem>>, %arg4: memref<1x32xf32, #tpu.memory_space<vmem>>, %arg5: memref<1x48xf32, #tpu.memory_space<vmem>>, %arg6: memref<1x16xf32, #tpu.memory_space<vmem>>, %arg7: memref<1x1xf32, #tpu.memory_space<smem>>, %arg8: memref<1x128xf32, #tpu.memory_space<vmem>>) attributes {dimension_semantics = [#tpu.dimension_semantics<parallel>], iteration_bounds = array<i64: 1>, scalar_prefetch = 0 : i64, scratch_operands = 0 : i64, tpu.core_type = #tpu.core_type<tc>, window_params = [{transform_indices = @transform_0, window_bounds = array<i64: 128, 32>}, {transform_indices = @transform_1, window_bounds = array<i64: 128, 48>}, {transform_indices = @transform_2, window_bounds = array<i64: 128, 16>}, {pipeline_mode = #tpu.pipeline_mode<synchronous>, transform_indices = @transform_3, window_bounds = array<i64: 1, 32>}, {pipeline_mode = #tpu.pipeline_mode<synchronous>, transform_indices = @transform_4, window_bounds = array<i64: 1, 48>}, {pipeline_mode = #tpu.pipeline_mode<synchronous>, transform_indices = @transform_5, window_bounds = array<i64: 1, 16>}, {transform_indices = @transform_6, window_bounds = array<i64: 1, 1>}, {transform_indices = @transform_7, window_bounds = array<i64: 1, 128>}]} {
    %c0 = arith.constant 0 : index
    %c0_0 = arith.constant 0 : index
    %0 = vector.load %arg1[%c0, %c0_0] : memref<128x32xf32, #tpu.memory_space<vmem>>, vector<128x32xf32>
    %c0_1 = arith.constant 0 : index
    %c0_2 = arith.constant 0 : index
    %1 = vector.load %arg4[%c0_1, %c0_2] : memref<1x32xf32, #tpu.memory_space<vmem>>, vector<1x32xf32>
    %2 = vector.broadcast %1 : vector<1x32xf32> to vector<128x32xf32>
    %3 = arith.mulf %0, %2 : vector<128x32xf32>
    %cst = arith.constant dense<0.000000e+00> : vector<128xf32>
    %4 = vector.multi_reduction <add>, %3, %cst [1] : vector<128x32xf32> to vector<128xf32>
    %c0_3 = arith.constant 0 : index
    %c0_4 = arith.constant 0 : index
    %5 = vector.load %arg2[%c0_3, %c0_4] : memref<128x48xf32, #tpu.memory_space<vmem>>, vector<128x48xf32>
    %c0_5 = arith.constant 0 : index
    %c0_6 = arith.constant 0 : index
    %6 = vector.load %arg5[%c0_5, %c0_6] : memref<1x48xf32, #tpu.memory_space<vmem>>, vector<1x48xf32>
    %7 = vector.broadcast %6 : vector<1x48xf32> to vector<128x48xf32>
    %8 = arith.mulf %5, %7 : vector<128x48xf32>
    %cst_7 = arith.constant dense<0.000000e+00> : vector<128xf32>
    %9 = vector.multi_reduction <add>, %8, %cst_7 [1] : vector<128x48xf32> to vector<128xf32>
    %10 = arith.addf %4, %9 : vector<128xf32>
    %c0_8 = arith.constant 0 : index
    %c0_9 = arith.constant 0 : index
    %11 = vector.load %arg3[%c0_8, %c0_9] : memref<128x16xf32, #tpu.memory_space<vmem>>, vector<128x16xf32>
    %c0_10 = arith.constant 0 : index
    %c0_11 = arith.constant 0 : index
    %12 = vector.load %arg6[%c0_10, %c0_11] : memref<1x16xf32, #tpu.memory_space<vmem>>, vector<1x16xf32>
    %13 = vector.broadcast %12 : vector<1x16xf32> to vector<128x16xf32>
    %14 = arith.mulf %11, %13 : vector<128x16xf32>
    %cst_12 = arith.constant dense<0.000000e+00> : vector<128xf32>
    %15 = vector.multi_reduction <add>, %14, %cst_12 [1] : vector<128x16xf32> to vector<128xf32>
    %16 = arith.addf %10, %15 : vector<128xf32>
    %c0_13 = arith.constant 0 : index
    %c0_14 = arith.constant 0 : index
    %17 = memref.load %arg7[%c0_13, %c0_14] : memref<1x1xf32, #tpu.memory_space<smem>>
    %18 = vector.broadcast %17 : f32 to vector<128xf32>
    %19 = arith.addf %16, %18 : vector<128xf32>
    %20 = vector.shape_cast %19 : vector<128xf32> to vector<1x128xf32>
    %c0_15 = arith.constant 0 : index
    %c0_16 = arith.constant 0 : index
    %21 = vector.load %arg8[%c0_15, %c0_16] : memref<1x128xf32, #tpu.memory_space<vmem>>, vector<1x128xf32>
    tpu.vector_store %arg8[%c0_15, %c0_16], %20 {strides = array<i32>} : memref<1x128xf32, #tpu.memory_space<vmem>>, vector<1x128xf32>,
    return
  }
  func.func @transform_0(%arg0: i32) -> (i32, i32) {
    %c0_i32 = arith.constant 0 : i32
    %c0_i32_0 = arith.constant 0 : i32
    return %arg0, %c0_i32 : i32, i32
  }
  func.func @transform_1(%arg0: i32) -> (i32, i32) {
    %c0_i32 = arith.constant 0 : i32
    %c0_i32_0 = arith.constant 0 : i32
    return %arg0, %c0_i32 : i32, i32
  }
  func.func @transform_2(%arg0: i32) -> (i32, i32) {
    %c0_i32 = arith.constant 0 : i32
    %c0_i32_0 = arith.constant 0 : i32
    return %arg0, %c0_i32 : i32, i32
  }
  func.func @transform_3(%arg0: i32) -> (i32, i32) {
    %c0_i32 = arith.constant 0 : i32
    %c0_i32_0 = arith.constant 0 : i32
    %c0_i32_1 = arith.constant 0 : i32
    return %c0_i32, %c0_i32_0 : i32, i32
  }
  func.func @transform_4(%arg0: i32) -> (i32, i32) {
    %c0_i32 = arith.constant 0 : i32
    %c0_i32_0 = arith.constant 0 : i32
    %c0_i32_1 = arith.constant 0 : i32
    return %c0_i32, %c0_i32_0 : i32, i32
  }
  func.func @transform_5(%arg0: i32) -> (i32, i32) {
    %c0_i32 = arith.constant 0 : i32
    %c0_i32_0 = arith.constant 0 : i32
    %c0_i32_1 = arith.constant 0 : i32
    return %c0_i32, %c0_i32_0 : i32, i32
  }
  func.func @transform_6(%arg0: i32) -> (i32, i32) {
    %c0_i32 = arith.constant 0 : i32
    %c0_i32_0 = arith.constant 0 : i32
    %c0_i32_1 = arith.constant 0 : i32
    return %c0_i32, %c0_i32_0 : i32, i32
  }
  func.func @transform_7(%arg0: i32) -> (i32, i32) {
    %c0_i32 = arith.constant 0 : i32
    %c0_i32_0 = arith.constant 0 : i32
    return %arg0, %c0_i32 : i32, i32
  }
}

</mosaic_0001>

<llo_original>
// kernel: tpu_custom_call.1
$region0: #{tpu_custom_call.1}
  #allocation0 [shape = 'u32[]', space=smem, size = 0x4, offset = 0x4, fixed_abs, tag = 'smem constant byte address 0x4 - core index']
  #allocation1 [shape = 'u32[144,128]{1,0:T(1,128)}', space=vmem, size = 0x12000, scoped, tag = 'internal scratch']
  #allocation2 [shape = 'f32[1,1]{1,0:T(1,128)S(6)}', space=smem, size = 0x200, scoped, tag = 'scoped memory for tpu_custom_call.1']
  %s0 = inlined_call_operand.vmem [shape: f32[128,32], index: 0, kind: input, shape index: {}]
  %s1 = inlined_call_operand.vmem [shape: f32[128,48], index: 1, kind: input, shape index: {}]
  %s2 = inlined_call_operand.vmem [shape: f32[128,16], index: 2, kind: input, shape index: {}]
  %s3 = inlined_call_operand.vmem [shape: f32[1,32], index: 3, kind: input, shape index: {}]
  %s4 = inlined_call_operand.vmem [shape: f32[1,48], index: 4, kind: input, shape index: {}]
  %s5 = inlined_call_operand.vmem [shape: f32[1,16], index: 5, kind: input, shape index: {}]
  %s6 = inlined_call_operand.<no memory space> [shape: f32[1,1], index: 6, kind: input, shape index: {}]
  %s7 = inlined_call_operand.hbm [shape: f32[1,128], index: 7, kind: output, shape index: {}]
  %s8 = sld [smem:[#allocation0]]
  $region38: #{tpu_custom_call.1} parent=0
    _
  %s10 = ssub.s32 1, %s8
  %s11 = scalar_select 0, %s10, %s8
  %12 = sst [smem:[#allocation2]] %s6
  $region1: #{tpu_custom_call.1} parent=0
    #allocation3 [shape = 'u8[512]{0}', space=vmem, size = 0x400, scoped, tag = 'output window, operand 0, single buffered']
    #allocation4 [shape = 's32[1]{0}', space=sflag, size = 0x4, scoped, tag = 'scoped memory for tpu_custom_call.1']
    %13 = vsyncpa [#allocation4], 0
    // Predicated region
    $region2: #{tpu_custom_call.1} parent=1 // pred_check
      _
    $region3: #{tpu_custom_call.1} parent=1 // pred_check_branch
      %15 = sbr.rel (0) target = $region5
    $region4: #{tpu_custom_call.1} parent=1 // pred_region
      _
    $region5: #{tpu_custom_call.1} parent=1 // pred_fallthru
      _
    // Predicated region
    $region6: #{tpu_custom_call.1} parent=1 // pred_check
      _
    $region7: #{tpu_custom_call.1} parent=1 // pred_check_branch
      %17 = sbr.rel (0) target = $region9
    $region8: #{tpu_custom_call.1} parent=1 // pred_region
      _
    $region9: #{tpu_custom_call.1} parent=1 // pred_fallthru
      _
    // Predicated region
    $region10: #{tpu_custom_call.1} parent=1 // pred_check
      _
    $region11: #{tpu_custom_call.1} parent=1 // pred_check_branch
      %19 = sbr.rel (0) target = $region13
    $region12: #{tpu_custom_call.1} parent=1 // pred_region
      _
    $region13: #{tpu_custom_call.1} parent=1 // pred_fallthru
      _
    // Predicated region
    $region14: #{tpu_custom_call.1} parent=1 // pred_check
      _
    $region15: #{tpu_custom_call.1} parent=1 // pred_check_branch
      %21 = sbr.rel (0) target = $region17
    $region16: #{tpu_custom_call.1} parent=1 // pred_region
      _
    $region17: #{tpu_custom_call.1} parent=1 // pred_fallthru
      _
    // Predicated region
    $region18: #{tpu_custom_call.1} parent=1 // pred_check
      _
    $region19: #{tpu_custom_call.1} parent=1 // pred_check_branch
      %23 = sbr.rel (0) target = $region21
    $region20: #{tpu_custom_call.1} parent=1 // pred_region
      _
    $region21: #{tpu_custom_call.1} parent=1 // pred_fallthru
      _
    // Predicated region
    $region22: #{tpu_custom_call.1} parent=1 // pred_check
      _
    $region23: #{tpu_custom_call.1} parent=1 // pred_check_branch
      %25 = sbr.rel (0) target = $region25
    $region24: #{tpu_custom_call.1} parent=1 // pred_region
      _
    $region25: #{tpu_custom_call.1} parent=1 // pred_fallthru
      _
    // Predicated region
    $region26: #{tpu_custom_call.1} parent=1 // pred_check
      _
    $region27: #{tpu_custom_call.1} parent=1 // pred_check_branch
      %27 = sbr.rel (0) target = $region29
    $region28: #{tpu_custom_call.1} parent=1 // pred_region
      _
    $region29: #{tpu_custom_call.1} parent=1 // pred_fallthru
      _
    %v28 = vld [vmem:[%s0] sm:$0xff]
    %v29 = vld [vmem:[%s0 + $0x8] sm:$0xff]
    %v30 = vld [vmem:[%s0 + $0x10] sm:$0xff]
    %v31 = vld [vmem:[%s0 + $0x18] sm:$0xff]
    %v32 = vld [vmem:[%s0 + $0x20] sm:$0xff]
    %v33 = vld [vmem:[%s0 + $0x28] sm:$0xff]
    %v34 = vld [vmem:[%s0 + $0x30] sm:$0xff]
    %v35 = vld [vmem:[%s0 + $0x38] sm:$0xff]
    %v36 = vld [vmem:[%s0 + $0x40] sm:$0xff]
    %v37 = vld [vmem:[%s0 + $0x48] sm:$0xff]
    %v38 = vld [vmem:[%s0 + $0x50] sm:$0xff]
    %v39 = vld [vmem:[%s0 + $0x58] sm:$0xff]
    %v40 = vld [vmem:[%s0 + $0x60] sm:$0xff]
    %v41 = vld [vmem:[%s0 + $0x68] sm:$0xff]
    %v42 = vld [vmem:[%s0 + $0x70] sm:$0xff]
    %v43 = vld [vmem:[%s0 + $0x78] sm:$0xff]
    %v44 = vld [vmem:[%s3] sm:$0x1]
    %v46 = vlaneseq
    %v47 = vshrl.u32 %v46, 7
    %v48 = vsub.s32 0, %v47
    %v49 = vrot.slane %v44, %v48
    %v51 = vmul.f32 %v28, %v49
    %v52 = vmul.f32 %v29, %v49
    %v53 = vmul.f32 %v30, %v49
    %v54 = vmul.f32 %v31, %v49
    %v55 = vmul.f32 %v32, %v49
    %v56 = vmul.f32 %v33, %v49
    %v57 = vmul.f32 %v34, %v49
    %v58 = vmul.f32 %v35, %v49
    %v59 = vmul.f32 %v36, %v49
    %v60 = vmul.f32 %v37, %v49
    %v61 = vmul.f32 %v38, %v49
    %v62 = vmul.f32 %v39, %v49
    %v63 = vmul.f32 %v40, %v49
    %v64 = vmul.f32 %v41, %v49
    %v65 = vmul.f32 %v42, %v49
    %v66 = vmul.f32 %v43, %v49
    %vm67 = vcmask 261120
    %v68 = vsel %vm67, %v51, 0.0
    %69 = vadd.xlane.f32.xlu0 %v68
    %v70 = vpop.xlane.xlu0 %69
    %v71 = vsel %vm67, %v52, 0.0
    %72 = vadd.xlane.f32.xlu0 %v71
    %v73 = vpop.xlane.xlu0 %72
    %v74 = vsel %vm67, %v53, 0.0
    %75 = vadd.xlane.f32.xlu0 %v74
    %v76 = vpop.xlane.xlu0 %75
    %v77 = vsel %vm67, %v54, 0.0
    %78 = vadd.xlane.f32.xlu0 %v77
    %v79 = vpop.xlane.xlu0 %78
    %v80 = vsel %vm67, %v55, 0.0
    %81 = vadd.xlane.f32.xlu0 %v80
    %v82 = vpop.xlane.xlu0 %81
    %v83 = vsel %vm67, %v56, 0.0
    %84 = vadd.xlane.f32.xlu0 %v83
    %v85 = vpop.xlane.xlu0 %84
    %v86 = vsel %vm67, %v57, 0.0
    %87 = vadd.xlane.f32.xlu0 %v86
    %v88 = vpop.xlane.xlu0 %87
    %v89 = vsel %vm67, %v58, 0.0
    %90 = vadd.xlane.f32.xlu0 %v89
    %v91 = vpop.xlane.xlu0 %90
    %v92 = vsel %vm67, %v59, 0.0
    %93 = vadd.xlane.f32.xlu0 %v92
    %v94 = vpop.xlane.xlu0 %93
    %v95 = vsel %vm67, %v60, 0.0
    %96 = vadd.xlane.f32.xlu0 %v95
    %v97 = vpop.xlane.xlu0 %96
    %v98 = vsel %vm67, %v61, 0.0
    %99 = vadd.xlane.f32.xlu0 %v98
    %v100 = vpop.xlane.xlu0 %99
    %v101 = vsel %vm67, %v62, 0.0
    %102 = vadd.xlane.f32.xlu0 %v101
    %v103 = vpop.xlane.xlu0 %102
    %v104 = vsel %vm67, %v63, 0.0
    %105 = vadd.xlane.f32.xlu0 %v104
    %v106 = vpop.xlane.xlu0 %105
    %v107 = vsel %vm67, %v64, 0.0
    %108 = vadd.xlane.f32.xlu0 %v107
    %v109 = vpop.xlane.xlu0 %108
    %v110 = vsel %vm67, %v65, 0.0
    %111 = vadd.xlane.f32.xlu0 %v110
    %v112 = vpop.xlane.xlu0 %111
    %v113 = vsel %vm67, %v66, 0.0
    %114 = vadd.xlane.f32.xlu0 %v113
    %v115 = vpop.xlane.xlu0 %114
    %v116 = vld [vmem:[%s1] sm:$0xff]
    %v117 = vld [vmem:[%s1 + $0x8] sm:$0xff]
    %v118 = vld [vmem:[%s1 + $0x10] sm:$0xff]
    %v119 = vld [vmem:[%s1 + $0x18] sm:$0xff]
    %v120 = vld [vmem:[%s1 + $0x20] sm:$0xff]
    %v121 = vld [vmem:[%s1 + $0x28] sm:$0xff]
    %v122 = vld [vmem:[%s1 + $0x30] sm:$0xff]
    %v123 = vld [vmem:[%s1 + $0x38] sm:$0xff]
    %v124 = vld [vmem:[%s1 + $0x40] sm:$0xff]
    %v125 = vld [vmem:[%s1 + $0x48] sm:$0xff]
    %v126 = vld [vmem:[%s1 + $0x50] sm:$0xff]
    %v127 = vld [vmem:[%s1 + $0x58] sm:$0xff]
    %v128 = vld [vmem:[%s1 + $0x60] sm:$0xff]
    %v129 = vld [vmem:[%s1 + $0x68] sm:$0xff]
    %v130 = vld [vmem:[%s1 + $0x70] sm:$0xff]
    %v131 = vld [vmem:[%s1 + $0x78] sm:$0xff]
    %v132 = vld [vmem:[%s4] sm:$0x1]
    %v134 = vlaneseq
    %v135 = vshrl.u32 %v134, 7
    %v136 = vsub.s32 0, %v135
    %v137 = vrot.slane %v132, %v136
    %v139 = vmul.f32 %v116, %v137
    %v140 = vmul.f32 %v117, %v137
    %v141 = vmul.f32 %v118, %v137
    %v142 = vmul.f32 %v119, %v137
    %v143 = vmul.f32 %v120, %v137
    %v144 = vmul.f32 %v121, %v137
    %v145 = vmul.f32 %v122, %v137
    %v146 = vmul.f32 %v123, %v137
    %v147 = vmul.f32 %v124, %v137
    %v148 = vmul.f32 %v125, %v137
    %v149 = vmul.f32 %v126, %v137
    %v150 = vmul.f32 %v127, %v137
    %v151 = vmul.f32 %v128, %v137
    %v152 = vmul.f32 %v129, %v137
    %v153 = vmul.f32 %v130, %v137
    %v154 = vmul.f32 %v131, %v137
    %vm155 = vcmask 392192
    %v156 = vsel %vm155, %v139, 0.0
    %157 = vadd.xlane.f32.xlu0 %v156
    %v158 = vpop.xlane.xlu0 %157
    %v159 = vsel %vm155, %v140, 0.0
    %160 = vadd.xlane.f32.xlu0 %v159
    %v161 = vpop.xlane.xlu0 %160
    %v162 = vsel %vm155, %v141, 0.0
    %163 = vadd.xlane.f32.xlu0 %v162
    %v164 = vpop.xlane.xlu0 %163
    %v165 = vsel %vm155, %v142, 0.0
    %166 = vadd.xlane.f32.xlu0 %v165
    %v167 = vpop.xlane.xlu0 %166
    %v168 = vsel %vm155, %v143, 0.0
    %169 = vadd.xlane.f32.xlu0 %v168
    %v170 = vpop.xlane.xlu0 %169
    %v171 = vsel %vm155, %v144, 0.0
    %172 = vadd.xlane.f32.xlu0 %v171
    %v173 = vpop.xlane.xlu0 %172
    %v174 = vsel %vm155, %v145, 0.0
    %175 = vadd.xlane.f32.xlu0 %v174
    %v176 = vpop.xlane.xlu0 %175
    %v177 = vsel %vm155, %v146, 0.0
    %178 = vadd.xlane.f32.xlu0 %v177
    %v179 = vpop.xlane.xlu0 %178
    %v180 = vsel %vm155, %v147, 0.0
    %181 = vadd.xlane.f32.xlu0 %v180
    %v182 = vpop.xlane.xlu0 %181
    %v183 = vsel %vm155, %v148, 0.0
    %184 = vadd.xlane.f32.xlu0 %v183
    %v185 = vpop.xlane.xlu0 %184
    %v186 = vsel %vm155, %v149, 0.0
    %187 = vadd.xlane.f32.xlu0 %v186
    %v188 = vpop.xlane.xlu0 %187
    %v189 = vsel %vm155, %v150, 0.0
    %190 = vadd.xlane.f32.xlu0 %v189
    %v191 = vpop.xlane.xlu0 %190
    %v192 = vsel %vm155, %v151, 0.0
    %193 = vadd.xlane.f32.xlu0 %v192
    %v194 = vpop.xlane.xlu0 %193
    %v195 = vsel %vm155, %v152, 0.0
    %196 = vadd.xlane.f32.xlu0 %v195
    %v197 = vpop.xlane.xlu0 %196
    %v198 = vsel %vm155, %v153, 0.0
    %199 = vadd.xlane.f32.xlu0 %v198
    %v200 = vpop.xlane.xlu0 %199
    %v201 = vsel %vm155, %v154, 0.0
    %202 = vadd.xlane.f32.xlu0 %v201
    %v203 = vpop.xlane.xlu0 %202
    %v204 = vadd.f32 %v70, %v158
    %v205 = vadd.f32 %v73, %v161
    %v206 = vadd.f32 %v76, %v164
    %v207 = vadd.f32 %v79, %v167
    %v208 = vadd.f32 %v82, %v170
    %v209 = vadd.f32 %v85, %v173
    %v210 = vadd.f32 %v88, %v176
    %v211 = vadd.f32 %v91, %v179
    %v212 = vadd.f32 %v94, %v182
    %v213 = vadd.f32 %v97, %v185
    %v214 = vadd.f32 %v100, %v188
    %v215 = vadd.f32 %v103, %v191
    %v216 = vadd.f32 %v106, %v194
    %v217 = vadd.f32 %v109, %v197
    %v218 = vadd.f32 %v112, %v200
    %v219 = vadd.f32 %v115, %v203
    %v220 = vld [vmem:[%s2] sm:$0xff]
    %v221 = vld [vmem:[%s2 + $0x8] sm:$0xff]
    %v222 = vld [vmem:[%s2 + $0x10] sm:$0xff]
    %v223 = vld [vmem:[%s2 + $0x18] sm:$0xff]
    %v224 = vld [vmem:[%s2 + $0x20] sm:$0xff]
    %v225 = vld [vmem:[%s2 + $0x28] sm:$0xff]
    %v226 = vld [vmem:[%s2 + $0x30] sm:$0xff]
    %v227 = vld [vmem:[%s2 + $0x38] sm:$0xff]
    %v228 = vld [vmem:[%s2 + $0x40] sm:$0xff]
    %v229 = vld [vmem:[%s2 + $0x48] sm:$0xff]
    %v230 = vld [vmem:[%s2 + $0x50] sm:$0xff]
    %v231 = vld [vmem:[%s2 + $0x58] sm:$0xff]
    %v232 = vld [vmem:[%s2 + $0x60] sm:$0xff]
    %v233 = vld [vmem:[%s2 + $0x68] sm:$0xff]
    %v234 = vld [vmem:[%s2 + $0x70] sm:$0xff]
    %v235 = vld [vmem:[%s2 + $0x78] sm:$0xff]
    %v236 = vld [vmem:[%s5] sm:$0x1]
    %v238 = vlaneseq
    %v239 = vshrl.u32 %v238, 7
    %v240 = vsub.s32 0, %v239
    %v241 = vrot.slane %v236, %v240
    %v243 = vmul.f32 %v220, %v241
    %v244 = vmul.f32 %v221, %v241
    %v245 = vmul.f32 %v222, %v241
    %v246 = vmul.f32 %v223, %v241
    %v247 = vmul.f32 %v224, %v241
    %v248 = vmul.f32 %v225, %v241
    %v249 = vmul.f32 %v226, %v241
    %v250 = vmul.f32 %v227, %v241
    %v251 = vmul.f32 %v228, %v241
    %v252 = vmul.f32 %v229, %v241
    %v253 = vmul.f32 %v230, %v241
    %v254 = vmul.f32 %v231, %v241
    %v255 = vmul.f32 %v232, %v241
    %v256 = vmul.f32 %v233, %v241
    %v257 = vmul.f32 %v234, %v241
    %v258 = vmul.f32 %v235, %v241
    %vm259 = vcmask 130048
    %v260 = vsel %vm259, %v243, 0.0
    %261 = vadd.xlane.f32.xlu0 %v260
    %v262 = vpop.xlane.xlu0 %261
    %v263 = vsel %vm259, %v244, 0.0
    %264 = vadd.xlane.f32.xlu0 %v263
    %v265 = vpop.xlane.xlu0 %264
    %v266 = vsel %vm259, %v245, 0.0
    %267 = vadd.xlane.f32.xlu0 %v266
    %v268 = vpop.xlane.xlu0 %267
    %v269 = vsel %vm259, %v246, 0.0
    %270 = vadd.xlane.f32.xlu0 %v269
    %v271 = vpop.xlane.xlu0 %270
    %v272 = vsel %vm259, %v247, 0.0
    %273 = vadd.xlane.f32.xlu0 %v272
    %v274 = vpop.xlane.xlu0 %273
    %v275 = vsel %vm259, %v248, 0.0
    %276 = vadd.xlane.f32.xlu0 %v275
    %v277 = vpop.xlane.xlu0 %276
    %v278 = vsel %vm259, %v249, 0.0
    %279 = vadd.xlane.f32.xlu0 %v278
    %v280 = vpop.xlane.xlu0 %279
    %v281 = vsel %vm259, %v250, 0.0
    %282 = vadd.xlane.f32.xlu0 %v281
    %v283 = vpop.xlane.xlu0 %282
    %v284 = vsel %vm259, %v251, 0.0
    %285 = vadd.xlane.f32.xlu0 %v284
    %v286 = vpop.xlane.xlu0 %285
    %v287 = vsel %vm259, %v252, 0.0
    %288 = vadd.xlane.f32.xlu0 %v287
    %v289 = vpop.xlane.xlu0 %288
    %v290 = vsel %vm259, %v253, 0.0
    %291 = vadd.xlane.f32.xlu0 %v290
    %v292 = vpop.xlane.xlu0 %291
    %v293 = vsel %vm259, %v254, 0.0
    %294 = vadd.xlane.f32.xlu0 %v293
    %v295 = vpop.xlane.xlu0 %294
    %v296 = vsel %vm259, %v255, 0.0
    %297 = vadd.xlane.f32.xlu0 %v296
    %v298 = vpop.xlane.xlu0 %297
    %v299 = vsel %vm259, %v256, 0.0
    %300 = vadd.xlane.f32.xlu0 %v299
    %v301 = vpop.xlane.xlu0 %300
    %v302 = vsel %vm259, %v257, 0.0
    %303 = vadd.xlane.f32.xlu0 %v302
    %v304 = vpop.xlane.xlu0 %303
    %v305 = vsel %vm259, %v258, 0.0
    %306 = vadd.xlane.f32.xlu0 %v305
    %v307 = vpop.xlane.xlu0 %306
    %v308 = vadd.f32 %v204, %v262
    %v309 = vadd.f32 %v205, %v265
    %v310 = vadd.f32 %v206, %v268
    %v311 = vadd.f32 %v207, %v271
    %v312 = vadd.f32 %v208, %v274
    %v313 = vadd.f32 %v209, %v277
    %v314 = vadd.f32 %v210, %v280
    %v315 = vadd.f32 %v211, %v283
    %v316 = vadd.f32 %v212, %v286
    %v317 = vadd.f32 %v213, %v289
    %v318 = vadd.f32 %v214, %v292
    %v319 = vadd.f32 %v215, %v295
    %v320 = vadd.f32 %v216, %v298
    %v321 = vadd.f32 %v217, %v301
    %v322 = vadd.f32 %v218, %v304
    %v323 = vadd.f32 %v219, %v307
    %s324 = sld [smem:[#allocation2]]
    %v325 = vstv %s324
    %v326 = vadd.f32 %v308, %v325
    %v327 = vadd.f32 %v309, %v325
    %v328 = vadd.f32 %v310, %v325
    %v329 = vadd.f32 %v311, %v325
    %v330 = vadd.f32 %v312, %v325
    %v331 = vadd.f32 %v313, %v325
    %v332 = vadd.f32 %v314, %v325
    %v333 = vadd.f32 %v315, %v325
    %v334 = vadd.f32 %v316, %v325
    %v335 = vadd.f32 %v317, %v325
    %v336 = vadd.f32 %v318, %v325
    %v337 = vadd.f32 %v319, %v325
    %v338 = vadd.f32 %v320, %v325
    %v339 = vadd.f32 %v321, %v325
    %v340 = vadd.f32 %v322, %v325
    %v341 = vadd.f32 %v323, %v325
    %v358 = vlaneseq
    %v359 = vand.u32 %v358, 127
    %v360 = vlaneseq
    %v361 = vshrl.u32 %v360, 7
    %v362 = vsub.s32 %v359, %v361
    %v363 = vrot.slane %v326, %v362
    %v364 = vadd.s32 %v359, 4294967288
    %v365 = vlaneseq
    %v366 = vshrl.u32 %v365, 7
    %v367 = vsub.s32 %v364, %v366
    %v368 = vrot.slane %v327, %v367
    %vm369 = vcmask 130112
    %v370 = vsel %vm369, %v368, %v363
    %v371 = vadd.s32 %v359, 4294967280
    %v372 = vlaneseq
    %v373 = vshrl.u32 %v372, 7
    %v374 = vsub.s32 %v371, %v373
    %v375 = vrot.slane %v328, %v374
    %vm376 = vcmask 195712
    %v377 = vsel %vm376, %v375, %v370
    %v378 = vadd.s32 %v359, 4294967272
    %v379 = vlaneseq
    %v380 = vshrl.u32 %v379, 7
    %v381 = vsub.s32 %v378, %v380
    %v382 = vrot.slane %v329, %v381
    %vm383 = vcmask 261312
    %v384 = vsel %vm383, %v382, %v377
    %v385 = vadd.s32 %v359, 4294967264
    %v386 = vlaneseq
    %v387 = vshrl.u32 %v386, 7
    %v388 = vsub.s32 %v385, %v387
    %v389 = vrot.slane %v330, %v388
    %vm390 = vcmask 326912
    %v391 = vsel %vm390, %v389, %v384
    %v392 = vadd.s32 %v359, 4294967256
    %v393 = vlaneseq
    %v394 = vshrl.u32 %v393, 7
    %v395 = vsub.s32 %v392, %v394
    %v396 = vrot.slane %v331, %v395
    %vm397 = vcmask 392512
    %v398 = vsel %vm397, %v396, %v391
    %v399 = vadd.s32 %v359, 4294967248
    %v400 = vlaneseq
    %v401 = vshrl.u32 %v400, 7
    %v402 = vsub.s32 %v399, %v401
    %v403 = vrot.slane %v332, %v402
    %vm404 = vcmask 458112
    %v405 = vsel %vm404, %v403, %v398
    %v406 = vadd.s32 %v359, 4294967240
    %v407 = vlaneseq
    %v408 = vshrl.u32 %v407, 7
    %v409 = vsub.s32 %v406, %v408
    %v410 = vrot.slane %v333, %v409
    %vm411 = vcmask 523712
    %v412 = vsel %vm411, %v410, %v405
    %v413 = vadd.s32 %v359, 4294967232
    %v414 = vlaneseq
    %v415 = vshrl.u32 %v414, 7
    %v416 = vsub.s32 %v413, %v415
    %v417 = vrot.slane %v334, %v416
    %vm418 = vcmask 589312
    %v419 = vsel %vm418, %v417, %v412
    %v420 = vadd.s32 %v359, 4294967224
    %v421 = vlaneseq
    %v422 = vshrl.u32 %v421, 7
    %v423 = vsub.s32 %v420, %v422
    %v424 = vrot.slane %v335, %v423
    %vm425 = vcmask 654912
    %v426 = vsel %vm425, %v424, %v419
    %v427 = vadd.s32 %v359, 4294967216
    %v428 = vlaneseq
    %v429 = vshrl.u32 %v428, 7
    %v430 = vsub.s32 %v427, %v429
    %v431 = vrot.slane %v336, %v430
    %vm432 = vcmask 720512
    %v433 = vsel %vm432, %v431, %v426
    %v434 = vadd.s32 %v359, 4294967208
    %v435 = vlaneseq
    %v436 = vshrl.u32 %v435, 7
    %v437 = vsub.s32 %v434, %v436
    %v438 = vrot.slane %v337, %v437
    %vm439 = vcmask 786112
    %v440 = vsel %vm439, %v438, %v433
    %v441 = vadd.s32 %v359, 4294967200
    %v442 = vlaneseq
    %v443 = vshrl.u32 %v442, 7
    %v444 = vsub.s32 %v441, %v443
    %v445 = vrot.slane %v338, %v444
    %vm446 = vcmask 851712
    %v447 = vsel %vm446, %v445, %v440
    %v448 = vadd.s32 %v359, 4294967192
    %v449 = vlaneseq
    %v450 = vshrl.u32 %v449, 7
    %v451 = vsub.s32 %v448, %v450
    %v452 = vrot.slane %v339, %v451
    %vm453 = vcmask 917312
    %v454 = vsel %vm453, %v452, %v447
    %v455 = vadd.s32 %v359, 4294967184
    %v456 = vlaneseq
    %v457 = vshrl.u32 %v456, 7
    %v458 = vsub.s32 %v455, %v457
    %v459 = vrot.slane %v340, %v458
    %vm460 = vcmask 982912
    %v461 = vsel %vm460, %v459, %v454
    %v462 = vadd.s32 %v359, 4294967176
    %v463 = vlaneseq
    %v464 = vshrl.u32 %v463, 7
    %v465 = vsub.s32 %v462, %v464
    %v466 = vrot.slane %v341, %v465
    %vm467 = vcmask 1048512
    %v468 = vsel %vm467, %v466, %v461
    %470 = vst [vmem:[#allocation3] sm:$0x1] %v468
    // Predicated region
    $region30: #{tpu_custom_call.1} parent=1 // pred_check
      _
    $region31: #{tpu_custom_call.1} parent=1 // pred_check_branch
      %472 = sbr.rel (0) target = $region33
    $region32: #{tpu_custom_call.1} parent=1 // pred_region
      %s474 = ssub.s32 16, 16
      %475 = vsyncadd [#allocation4], %s474
      %s477 = sshll.u32 [#allocation3], 4
      %s478 = int_to_ptr.vmem [resolvable:$true] %s477
      %480 = dma.vmem_to_hbm [thread:$0]  %s478, 16, %s7, [#allocation4]
    $region33: #{tpu_custom_call.1} parent=1 // pred_fallthru
      _
    // Predicated region
    $region34: #{tpu_custom_call.1} parent=1 // pred_check
      _
    $region35: #{tpu_custom_call.1} parent=1 // pred_check_branch
      %482 = sbr.rel (0) target = $region37
    $region36: #{tpu_custom_call.1} parent=1 // pred_region
      %483 = dma.done [#allocation4], 16
    $region37: #{tpu_custom_call.1} parent=1 // pred_fallthru
      _
    %484 = vsyncpa [#allocation4], 1

</llo_original>
